<compile_context>
chip_gen: v7x
topology: tpu7x:2x2x1
jax: 0.10.0
libtpu: 0.0.40
codegen_flags: <defaults>
</compile_context>

<pallas_src>
import jax
import jax.numpy as jnp
from jax import lax
from jax.experimental import pallas as pl
from jax.experimental.pallas import tpu as pltpu


def conv_bn_relu_kernel(x_ref, w_ref, sb_ref, o_ref):
    """Fused conv-as-matmul + BatchNorm(inference) + ReLU.

    x_ref:  (1, K, Mt)    bf16  im2col slab for one image / one M tile
    w_ref:  (Cout, K)     bf16  reshaped conv weights
    sb_ref: (Cout, 2)     f32   folded BN scale (col 0) and bias (col 1)
    o_ref:  (1, Cout, Mt) f32   channel-major output tile (Mt lane-dense)
    """
    # Single MXU matmul over the whole K = KH*KW*Cin contraction, f32 accumulate.
    acc = jnp.dot(w_ref[...], x_ref[0],
                  preferred_element_type=jnp.float32)        # (Cout, Mt)
    scale = sb_ref[:, 0:1]                                   # (Cout, 1)
    bias = sb_ref[:, 1:2]                                    # (Cout, 1)
    y = acc * scale + bias                                   # fused BN (eval) + conv bias
    o_ref[0] = jnp.maximum(y, 0.0).astype(o_ref.dtype)       # ReLU, lane-dense store


def _pick_m_tile(m_total):
    # Largest lane-dense (multiple-of-128) tile that divides M, capped so a
    # step's double-buffered blocks stay well inside VMEM; fall back to the
    # full extent (always legal: block dim == array dim).
    for t in (2048, 1024, 512, 256, 128):
        if m_total % t == 0:
            return t
    return m_total


def conv_block_forward(x_nchw, conv_w, conv_b, bn_gamma, bn_beta,
                       bn_mean, bn_var, *, padding=1, eps=1e-5,
                       matmul_dtype=jnp.bfloat16):
    """relu(batchnorm(conv2d(x))) with BatchNorm in inference mode.

    x_nchw: (N, Cin, H, W); conv_w: (Cout, Cin, KH, KW); conv_b / BN: (Cout,)
    Returns (N, Cout, Ho, Wo) in NCHW, f32.
    """
    N, Cin, H, W = x_nchw.shape
    Cout, _, KH, KW = conv_w.shape
    Ho = H + 2 * padding - KH + 1
    Wo = W + 2 * padding - KW + 1
    K = KH * KW * Cin
    M = Ho * Wo

    # ---- Wrapper glue (plain XLA): pad, im2col, weight reshape, BN folding ----
    x_pad = jnp.pad(x_nchw, ((0, 0), (0, 0),
                             (padding, padding), (padding, padding)))
    # x_col[n, (kh*KW + kw)*Cin + cin, h*Wo + w] = x_pad[n, cin, h+kh, w+kw]
    taps = [x_pad[:, :, kh:kh + Ho, kw:kw + Wo]
            for kh in range(KH) for kw in range(KW)]          # each (N, Cin, Ho, Wo)
    x_col = jnp.stack(taps, axis=1).reshape(N, K, M).astype(matmul_dtype)

    # w_mat[cout, (kh*KW + kw)*Cin + cin] = conv_w[cout, cin, kh, kw]
    w_mat = jnp.transpose(conv_w, (0, 2, 3, 1)).reshape(Cout, K).astype(matmul_dtype)

    # Fold BN (running stats) + conv bias into per-channel scale/bias (f32).
    inv_std = 1.0 / jnp.sqrt(bn_var + eps)
    scale = bn_gamma * inv_std
    bias = bn_beta + (conv_b - bn_mean) * scale
    sb = jnp.stack([scale, bias], axis=1).astype(jnp.float32)  # (Cout, 2)

    m_tile = _pick_m_tile(M)
    grid = (N, M // m_tile)

    out = pl.pallas_call(
        conv_bn_relu_kernel,
        out_shape=jax.ShapeDtypeStruct((N, Cout, M), jnp.float32),
        grid_spec=pltpu.PrefetchScalarGridSpec(
            num_scalar_prefetch=0,
            grid=grid,
            in_specs=[
                pl.BlockSpec((1, K, m_tile), lambda n, j: (n, 0, j)),
                pl.BlockSpec((Cout, K), lambda n, j: (0, 0)),
                pl.BlockSpec((Cout, 2), lambda n, j: (0, 0)),
            ],
            out_specs=pl.BlockSpec((1, Cout, m_tile), lambda n, j: (n, 0, j)),
        ),
        compiler_params=pltpu.CompilerParams(
            dimension_semantics=("parallel", "parallel")),
    )(x_col, w_mat, sb)

    # Channel-major output: NCHW is just a free reshape (no transpose).
    return out.reshape(N, Cout, Ho, Wo)


def reference_forward(x_nchw, conv_w, conv_b, bn_gamma, bn_beta,
                      bn_mean, bn_var, *, padding=1, eps=1e-5,
                      matmul_dtype=None):
    """Pure-JAX reference (mirrors PyTorch conv2d + BN(eval) + ReLU)."""
    xx, ww = x_nchw, conv_w
    if matmul_dtype is not None:
        xx = xx.astype(matmul_dtype)
        ww = ww.astype(matmul_dtype)
    y = lax.conv_general_dilated(
        xx, ww, window_strides=(1, 1),
        padding=((padding, padding), (padding, padding)),
        dimension_numbers=("NCHW", "OIHW", "NCHW"),
        preferred_element_type=jnp.float32)
    y = y + conv_b.reshape(1, -1, 1, 1)
    y = (y - bn_mean.reshape(1, -1, 1, 1)) / jnp.sqrt(
        bn_var.reshape(1, -1, 1, 1) + eps)
    y = y * bn_gamma.reshape(1, -1, 1, 1) + bn_beta.reshape(1, -1, 1, 1)
    return jnp.maximum(y, 0.0)


if __name__ == "__main__":
    # ConvBlock(in_channels=4, out_channels=8, kernel_size=3, padding=1)
    N, Cin, H, W = 2, 4, 16, 16
    Cout, KH, KW = 8, 3, 3
    padding = 1

    key = jax.random.PRNGKey(0)
    k_x, k_w, k_b, k_g, k_be, k_m, k_v = jax.random.split(key, 7)

    x = jax.random.normal(k_x, (N, Cin, H, W), dtype=jnp.float32)
    conv_w = jax.random.normal(k_w, (Cout, Cin, KH, KW), dtype=jnp.float32) * 0.1
    conv_b = jax.random.normal(k_b, (Cout,), dtype=jnp.float32) * 0.1
    bn_gamma = 1.0 + 0.1 * jax.random.normal(k_g, (Cout,), dtype=jnp.float32)
    bn_beta = 0.1 * jax.random.normal(k_be, (Cout,), dtype=jnp.float32)
    bn_mean = 0.1 * jax.random.normal(k_m, (Cout,), dtype=jnp.float32)
    bn_var = jnp.abs(1.0 + 0.1 * jax.random.normal(k_v, (Cout,),
                                                   dtype=jnp.float32))
    # TODO(synk): BatchNorm is implemented in inference mode (running stats);
    # training-mode batch statistics are not computed. Stride/dilation != 1
    # would need a strided im2col in the wrapper.

    out = conv_block_forward(x, conv_w, conv_b, bn_gamma, bn_beta,
                             bn_mean, bn_var, padding=padding)
    out = jax.block_until_ready(out)
    assert out.shape == (N, Cout, H, W), out.shape

    # Tight check vs. a reference using the same bf16 matmul operands.
    ref_bf16 = reference_forward(x, conv_w, conv_b, bn_gamma, bn_beta,
                                 bn_mean, bn_var, padding=padding,
                                 matmul_dtype=jnp.bfloat16)
    ref_bf16 = jax.block_until_ready(ref_bf16)
    assert jnp.allclose(out, ref_bf16, atol=1e-3, rtol=1e-3), (
        float(jnp.max(jnp.abs(out - ref_bf16))))

    # Loose check vs. the full-f32 PyTorch-semantics reference (the only
    # difference is bf16 rounding of the matmul operands).
    ref_f32 = reference_forward(x, conv_w, conv_b, bn_gamma, bn_beta,
                                bn_mean, bn_var, padding=padding)
    ref_f32 = jax.block_until_ready(ref_f32)
    assert jnp.allclose(out, ref_f32, atol=5e-2, rtol=5e-2), (
        float(jnp.max(jnp.abs(out - ref_f32))))

    print("KERNEL_OK")
</pallas_src>

<mosaic_0001>
module attributes {stable_mosaic.version = 11 : i64} {
  func.func @conv_bn_relu_kernel(%arg0: i32, %arg1: i32, %arg2: memref<1x36x256xbf16, #tpu.memory_space<vmem>>, %arg3: memref<8x36xbf16, #tpu.memory_space<vmem>>, %arg4: memref<8x2xf32, #tpu.memory_space<vmem>>, %arg5: memref<1x8x256xf32, #tpu.memory_space<vmem>>) attributes {dimension_semantics = [#tpu.dimension_semantics<parallel>, #tpu.dimension_semantics<parallel>], iteration_bounds = array<i64: 2, 1>, scalar_prefetch = 0 : i64, scratch_operands = 0 : i64, tpu.core_type = #tpu.core_type<tc>, window_params = [{transform_indices = @transform_0, window_bounds = array<i64: 1, 36, 256>}, {pipeline_mode = #tpu.pipeline_mode<synchronous>, transform_indices = @transform_1, window_bounds = array<i64: 8, 36>}, {pipeline_mode = #tpu.pipeline_mode<synchronous>, transform_indices = @transform_2, window_bounds = array<i64: 8, 2>}, {transform_indices = @transform_3, window_bounds = array<i64: 1, 8, 256>}]} {
    %c0 = arith.constant 0 : index
    %c0_0 = arith.constant 0 : index
    %0 = vector.load %arg3[%c0, %c0_0] : memref<8x36xbf16, #tpu.memory_space<vmem>>, vector<8x36xbf16>
    %c0_1 = arith.constant 0 : index
    %c0_2 = arith.constant 0 : index
    %c0_3 = arith.constant 0 : index
    %1 = vector.load %arg2[%c0_1, %c0_2, %c0_3] : memref<1x36x256xbf16, #tpu.memory_space<vmem>>, vector<1x36x256xbf16>
    %2 = vector.shape_cast %1 : vector<1x36x256xbf16> to vector<36x256xbf16>
    %cst = arith.constant dense<0.000000e+00> : vector<8x256xf32>
    %3 = tpu.matmul %0, %2, %cst {dimension_numbers = #tpu.dot_dimension_numbers<[1], [0], [0], [1], [0, 0, 1, 1], [], []>} : vector<8x36xbf16>, vector<36x256xbf16>, vector<8x256xf32> -> vector<8x256xf32>
    %c0_4 = arith.constant 0 : index
    %c0_5 = arith.constant 0 : index
    %4 = vector.load %arg4[%c0_4, %c0_5] : memref<8x2xf32, #tpu.memory_space<vmem>>, vector<8x1xf32>
    %c0_6 = arith.constant 0 : index
    %c1 = arith.constant 1 : index
    %5 = vector.load %arg4[%c0_6, %c1] : memref<8x2xf32, #tpu.memory_space<vmem>>, vector<8x1xf32>
    %6 = vector.broadcast %4 : vector<8x1xf32> to vector<8x256xf32>
    %7 = arith.mulf %3, %6 : vector<8x256xf32>
    %8 = vector.broadcast %5 : vector<8x1xf32> to vector<8x256xf32>
    %9 = arith.addf %7, %8 : vector<8x256xf32>
    %cst_7 = arith.constant 0.000000e+00 : f32
    %10 = vector.broadcast %cst_7 : f32 to vector<8x256xf32>
    %11 = arith.maximumf %9, %10 : vector<8x256xf32>
    %c0_8 = arith.constant 0 : index
    %c0_9 = arith.constant 0 : index
    %c0_10 = arith.constant 0 : index
    %12 = vector.load %arg5[%c0_8, %c0_9, %c0_10] : memref<1x8x256xf32, #tpu.memory_space<vmem>>, vector<1x8x256xf32>
    %13 = vector.shape_cast %12 : vector<1x8x256xf32> to vector<8x256xf32>
    %14 = vector.shape_cast %11 : vector<8x256xf32> to vector<1x8x256xf32>
    tpu.vector_store %arg5[%c0_8, %c0_9, %c0_10], %14 {strides = array<i32>} : memref<1x8x256xf32, #tpu.memory_space<vmem>>, vector<1x8x256xf32>,
    return
  }
  func.func @transform_0(%arg0: i32, %arg1: i32) -> (i32, i32, i32) {
    %c0_i32 = arith.constant 0 : i32
    %c0_i32_0 = arith.constant 0 : i32
    return %arg0, %c0_i32, %arg1 : i32, i32, i32
  }
  func.func @transform_1(%arg0: i32, %arg1: i32) -> (i32, i32) {
    %c0_i32 = arith.constant 0 : i32
    %c0_i32_0 = arith.constant 0 : i32
    %c0_i32_1 = arith.constant 0 : i32
    return %c0_i32, %c0_i32_0 : i32, i32
  }
  func.func @transform_2(%arg0: i32, %arg1: i32) -> (i32, i32) {
    %c0_i32 = arith.constant 0 : i32
    %c0_i32_0 = arith.constant 0 : i32
    %c0_i32_1 = arith.constant 0 : i32
    return %c0_i32, %c0_i32_0 : i32, i32
  }
  func.func @transform_3(%arg0: i32, %arg1: i32) -> (i32, i32, i32) {
    %c0_i32 = arith.constant 0 : i32
    %c0_i32_0 = arith.constant 0 : i32
    return %arg0, %c0_i32, %arg1 : i32, i32, i32
  }
}

</mosaic_0001>

<llo_original>
// kernel: tpu_custom_call.1
$region0: #{tpu_custom_call.1}
  #allocation0 [shape = 'u32[]', space=smem, size = 0x4, offset = 0x4, fixed_abs, tag = 'smem constant byte address 0x4 - core index']
  #allocation1 [shape = 'u32[144,128]{1,0:T(1,128)}', space=vmem, size = 0x12000, scoped, tag = 'internal scratch']
  %s0 = inlined_call_operand.vmem [shape: bf16[2,36,256], index: 0, kind: input, shape index: {}]
  %s1 = inlined_call_operand.vmem [shape: bf16[8,36], index: 1, kind: input, shape index: {}]
  %s2 = inlined_call_operand.vmem [shape: f32[8,2], index: 2, kind: input, shape index: {}]
  %s3 = inlined_call_operand.hbm [shape: f32[2,8,256], index: 3, kind: output, shape index: {}]
  %s4 = sld [smem:[#allocation0]]
  $region45: #{tpu_custom_call.1} parent=0
    _
  %s6 = ssub.s32 1, %s4
  %s7 = scalar_select 0, %s6, %s4
  $region1: #{tpu_custom_call.1} parent=0
    #allocation2 [shape = 'u8[16384]{0}', space=vmem, size = 0x4000, scoped, tag = 'output window, operand 0']
    #allocation3 [shape = 's32[2]{0}', space=sflag, size = 0x8, scoped, tag = 'scoped memory for tpu_custom_call.1']
    %8 = vsyncpa [#allocation3], 0
    %s9 = scalar_lea.sflag [#allocation3], 1
    %10 = vsyncpa %s9, 0
    loop: start=0, step=1, limit=4
    $region2: #{tpu_custom_call.1} parent=1 // loop_pre_header
      _
    $region3: #{tpu_custom_call.1} parent=1 // loop_header
      %s12 = sphi 0, %s16
      %p13 = scmp.ge.s32.totalorder %s12, 4
      %s19 = sphi 0, %s31
      %s20 = sphi 0, %s27
      %s21 = sphi 0, %s19
      %s22 = sphi 0, %s20
      %s23 = sphi 0, %s21
      %s24 = sphi 0, %s22
      %s36 = sphi 0, %s38
      %s39 = sphi 0, %s36
      %s40 = sphi 0, %s39
      %s56 = sphi 0, %s40
      %s60 = sphi 0, %s60
      %s62 = sphi 0, %s60
      %s63 = sphi 0, %s62
      %s77 = sphi 0, %s63
      %s81 = sphi 0, %s81
      %s83 = sphi 0, %s81
      %s84 = sphi 0, %s83
      %s98 = sphi 0, %s84
      %s106 = sphi 0, %s108
      %s109 = sphi 0, %s106
      %s110 = sphi 0, %s109
      %s126 = sphi 0, %s110
    $region4: #{tpu_custom_call.1} parent=1 // loop_header_branch
      %15 = sbr.rel (%p13) target = $region8
    $region5: #{tpu_custom_call.1} parent=1 // loop_body
      %s17 = ssub.s32 %s12, 1
      %s18 = ssub.s32 %s12, 2
      %s25 = sadd.s32 1, %s20
      %p26 = scmp.ge.s32.totalorder %s25, 1
      %s27 = scalar_select %p26, 0, %s25
      %s28 = sadd.s32 1, %s19
      %s29 = scalar_select %p26, %s28, %s19
      %p30 = scmp.ge.s32.totalorder %s29, 2
      %s31 = scalar_select %p30, 0, %s29
      %s32 = ssub.s32 %s19, %s31
      %s33 = ssub.s32 %s20, %s27
      %s34 = sor.u32 %s32, %s33
      %p35 = scmp.eq.s32.totalorder %s34, 0
      %s37 = sadd.s32 %s36, 1
      %s38 = scalar_select %p35, %s36, %s37
      %p41 = pneg %p35
      %p42 = scmp.eq.s32.totalorder %s12, 1
      %p43 = por %p41, %p42
      %p44 = scmp.ne.s32.totalorder %s36, %s39
      %p45 = scmp.eq.s32.totalorder %s12, 0
      %p46 = por %p44, %p45
      %p47 = scmp.ne.s32.totalorder %s36, %s39
      %p48 = scmp.eq.s32.totalorder %s17, 1
      %p49 = por %p47, %p48
      %p50 = scmp.ne.s32.totalorder %s39, %s40
      %p51 = scmp.eq.s32.totalorder %s17, 0
      %p52 = por %p50, %p51
      %p53 = scmp.ne.s32.totalorder %s39, %s40
      %p54 = scmp.eq.s32.totalorder %s18, 1
      %p55 = por %p53, %p54
      %p57 = scmp.ne.s32.totalorder %s40, %s56
      %p58 = scmp.eq.s32.totalorder %s18, 0
      %p59 = por %p57, %p58
      %s61 = sadd.s32 %s60, 1
      %p64 = scmp.eq.s32.totalorder %s12, 1
      %p65 = scmp.ne.s32.totalorder %s60, %s62
      %p66 = scmp.eq.s32.totalorder %s12, 0
      %p67 = por %p65, %p66
      %p68 = scmp.ne.s32.totalorder %s60, %s62
      %p69 = scmp.eq.s32.totalorder %s17, 1
      %p70 = por %p68, %p69
      %p71 = scmp.ne.s32.totalorder %s62, %s63
      %p72 = scmp.eq.s32.totalorder %s17, 0
      %p73 = por %p71, %p72
      %p74 = scmp.ne.s32.totalorder %s62, %s63
      %p75 = scmp.eq.s32.totalorder %s18, 1
      %p76 = por %p74, %p75
      %p78 = scmp.ne.s32.totalorder %s63, %s77
      %p79 = scmp.eq.s32.totalorder %s18, 0
      %p80 = por %p78, %p79
      %s82 = sadd.s32 %s81, 1
      %p85 = scmp.eq.s32.totalorder %s12, 1
      %p86 = scmp.ne.s32.totalorder %s81, %s83
      %p87 = scmp.eq.s32.totalorder %s12, 0
      %p88 = por %p86, %p87
      %p89 = scmp.ne.s32.totalorder %s81, %s83
      %p90 = scmp.eq.s32.totalorder %s17, 1
      %p91 = por %p89, %p90
      %p92 = scmp.ne.s32.totalorder %s83, %s84
      %p93 = scmp.eq.s32.totalorder %s17, 0
      %p94 = por %p92, %p93
      %p95 = scmp.ne.s32.totalorder %s83, %s84
      %p96 = scmp.eq.s32.totalorder %s18, 1
      %p97 = por %p95, %p96
      %p99 = scmp.ne.s32.totalorder %s84, %s98
      %p100 = scmp.eq.s32.totalorder %s18, 0
      %p101 = por %p99, %p100
      %s102 = ssub.s32 %s19, %s31
      %s103 = ssub.s32 %s20, %s27
      %s104 = sor.u32 %s102, %s103
      %p105 = scmp.eq.s32.totalorder %s104, 0
      %s107 = sadd.s32 %s106, 1
      %s108 = scalar_select %p105, %s106, %s107
      %p111 = pneg %p105
      %p112 = scmp.eq.s32.totalorder %s12, 1
      %p113 = por %p111, %p112
      %p114 = scmp.ne.s32.totalorder %s106, %s109
      %p115 = scmp.eq.s32.totalorder %s12, 0
      %p116 = por %p114, %p115
      %p117 = scmp.ne.s32.totalorder %s106, %s109
      %p118 = scmp.eq.s32.totalorder %s17, 1
      %p119 = por %p117, %p118
      %p120 = scmp.ne.s32.totalorder %s109, %s110
      %p121 = scmp.eq.s32.totalorder %s17, 0
      %p122 = por %p120, %p121
      %p123 = scmp.ne.s32.totalorder %s109, %s110
      %p124 = scmp.eq.s32.totalorder %s18, 1
      %p125 = por %p123, %p124
      %p127 = scmp.ne.s32.totalorder %s110, %s126
      %p128 = scmp.eq.s32.totalorder %s18, 0
      %p129 = por %p127, %p128
      %p130 = scmp.le.s32.totalorder 1, %s12
      %p131 = scmp.lt.s32.totalorder %s12, 3
      %p132 = pnand %p130, %p131
      %p133 = pneg %p132
      // Predicated region
      $region9: #{tpu_custom_call.1} parent=5 // pred_check
        _
      $region10: #{tpu_custom_call.1} parent=5 // pred_check_branch
        %135 = sbr.rel (%p132) target = $region12
      $region11: #{tpu_custom_call.1} parent=5 // pred_region
        %s136 = ssub.s32 %s12, 1
        // Predicated region
        $region13: #{tpu_custom_call.1} parent=11 // pred_check
          %p137 = pneg %p73
        $region14: #{tpu_custom_call.1} parent=11 // pred_check_branch
          %139 = sbr.rel (%p137) target = $region16
        $region15: #{tpu_custom_call.1} parent=11 // pred_region
          _
        $region16: #{tpu_custom_call.1} parent=11 // pred_fallthru
          _
        // Predicated region
        $region17: #{tpu_custom_call.1} parent=11 // pred_check
          %p140 = pneg %p94
        $region18: #{tpu_custom_call.1} parent=11 // pred_check_branch
          %142 = sbr.rel (%p140) target = $region20
        $region19: #{tpu_custom_call.1} parent=11 // pred_region
          _
        $region20: #{tpu_custom_call.1} parent=11 // pred_fallthru
          _
      $region12: #{tpu_custom_call.1} parent=5 // pred_fallthru
        _
      %p143 = scmp.lt.s32.totalorder %s12, 2
      // Predicated region
      $region21: #{tpu_custom_call.1} parent=5 // pred_check
        %p144 = pneg %p143
      $region22: #{tpu_custom_call.1} parent=5 // pred_check_branch
        %146 = sbr.rel (%p144) target = $region24
      $region23: #{tpu_custom_call.1} parent=5 // pred_region
        // Predicated region
        $region25: #{tpu_custom_call.1} parent=23 // pred_check
          %p147 = pneg %p46
        $region26: #{tpu_custom_call.1} parent=23 // pred_check_branch
          %149 = sbr.rel (%p147) target = $region28
        $region27: #{tpu_custom_call.1} parent=23 // pred_region
          %s150 = smul.u32 2, %s20
          %p151 = scmp.lt.s32.totalorder %s19, 1
          %s152 = scalar_select %p151, %s19, 1
          %p153 = scmp.lt.s32.totalorder %s150, 1
          %s154 = scalar_select %p153, %s150, 1
          %s155 = smul.addr %s152, 10
          %s156 = sadd.s32 %s154, %s155
          %s157 = smul.addr %s156, 4
          %s158 = scalar_lea.vmem %s0, %s157
          %s159 = smul.u32 2, %s20
        $region28: #{tpu_custom_call.1} parent=23 // pred_fallthru
          _
      $region24: #{tpu_custom_call.1} parent=5 // pred_fallthru
        _
      %p160 = scmp.le.s32.totalorder 1, %s12
      %p161 = scmp.lt.s32.totalorder %s12, 3
      %p162 = pnand %p160, %p161
      %p163 = pneg %p162
      // Predicated region
      $region29: #{tpu_custom_call.1} parent=5 // pred_check
        _
      $region30: #{tpu_custom_call.1} parent=5 // pred_check_branch
        %165 = sbr.rel (%p162) target = $region32
      $region31: #{tpu_custom_call.1} parent=5 // pred_region
        %s166 = ssub.s32 %s12, 1
        %s167 = smul.u32 2, %s22
        %p168 = scmp.lt.s32.totalorder %s21, 1
        %s169 = scalar_select %p168, %s21, 1
        %p170 = scmp.lt.s32.totalorder %s167, 1
        %s171 = scalar_select %p170, %s167, 1
        %s172 = smul.addr %s169, 10
        %s173 = sadd.s32 %s171, %s172
        %s174 = smul.addr %s173, 4
        %s175 = scalar_lea.vmem %s0, %s174
        %p176 = pneg %p52
        %p177 = pneg %p49
        %p178 = pneg %p73
        %p179 = pneg %p70
        %p180 = pneg %p94
        %p181 = pneg %p91
        %p182 = pneg %p122
        %p183 = pneg %p119
        %s184 = sand.u32 %s109, 1
        %s185 = scalar_lea.sflag [#allocation3], %s184
        %s186 = sand.u32 %s109, 1
        %s187 = smul.addr %s186, 16
        %s188 = scalar_lea.vmem [#allocation2], %s187
        %s189 = smul.u32 2, %s22
        %p190 = scmp.lt.s32.totalorder %s21, 1
        %s191 = scalar_select %p190, %s21, 1
        %p192 = scmp.lt.s32.totalorder %s189, 1
        %s193 = scalar_select %p192, %s189, 1
        %s194 = smul.addr %s191, 10
        %s195 = sadd.s32 %s193, %s194
        %s196 = smul.addr %s195, 4
        %s197 = scalar_lea.vmem %s0, %s196
        %s198 = smul.u32 2, %s22
        %s199 = smul.u32 2, %s22
        %v201 = vld [vmem:[%s1] sm:$0xf]
        %v202 = vld [vmem:[%s197] sm:$0xff]
        %v203 = vld [vmem:[%s197 + $0x8] sm:$0xff]
        %v204 = vld [vmem:[%s197 + $0x10] sm:$0xff]
        %v205 = vld [vmem:[%s197 + $0x18] sm:$0xff]
        %v206 = vld [vmem:[%s197 + $0x20] sm:$0x33]
        %v212 = vunpack.c.l.b16 %v202
        %v213 = vunpack.c.h.b16 %v202
        %v214 = vunpack.c.l.b16 %v203
        %v215 = vunpack.c.h.b16 %v203
        %v216 = vunpack.c.l.b16 %v204
        %v217 = vunpack.c.h.b16 %v204
        %v218 = vunpack.c.l.b16 %v205
        %v219 = vunpack.c.h.b16 %v205
        %v220 = vunpack.c.l.b16 %v206
        %v221 = vunpack.c.h.b16 %v206
        %v222 = vpack.c.b16 %v214, %v212
        %v223 = vpack.c.b16 %v215, %v213
        %v224 = vpack.c.b16 %v218, %v216
        %v225 = vpack.c.b16 %v219, %v217
        %v226 = vpack.c.b16 %v220, %v220
        %v227 = vpack.c.b16 %v221, %v221
        %vm232 = vcmask 293888
        %v234 = vsel %vm232, %v201, 0
        %vm236 = vcmask 1041408
        %v238 = vsel %vm236, %v226, 0
        %v241 = vsel %vm236, %v227, 0
        %243 = vmatprep.subr.bf16.mxu0 %v223
        %244 = vmatpush1.bf16.msra.mxu0 %v222
        %245 = vmatprep.subr.bf16.mxu0 %v225
        %246 = vmatpush1.bf16.msra.mxu0 %v224
        %247 = vmatprep.subr.bf16.mxu0 %v241
        %248 = vmatpush1.bf16.msra.mxu0 %v238
        %249 = vmatprep.subr.bf16.mxu0 0
        %250 = vmatpush1.bf16.msra.mxu0 0
        %251 = vmatprep.subr.bf16.mxu0 0
        %252 = vmatpush1.bf16.msra.mxu0 0
        %253 = vmatprep.subr.bf16.mxu0 0
        %254 = vmatpush1.bf16.msra.mxu0 0
        %255 = vmatprep.subr.bf16.mxu0 0
        %256 = vmatpush1.bf16.msra.mxu0 0
        %257 = vmatprep.subr.bf16.mxu0 0
        %258 = vmatpush1.bf16.msra.mxu0 0
        %259 = vmatprep.subr.bf16.mxu0 0
        %260 = vmatpush1.bf16.msra.mxu0 0
        %261 = vmatprep.subr.bf16.mxu0 0
        %262 = vmatpush1.bf16.msra.mxu0 0
        %263 = vmatprep.subr.bf16.mxu0 0
        %264 = vmatpush1.bf16.msra.mxu0 0
        %265 = vmatprep.subr.bf16.mxu0 0
        %266 = vmatpush1.bf16.msra.mxu0 0
        %267 = vmatprep.subr.bf16.mxu0 0
        %268 = vmatpush1.bf16.msra.mxu0 0
        %269 = vmatprep.subr.bf16.mxu0 0
        %270 = vmatpush1.bf16.msra.mxu0 0
        %271 = vmatprep.subr.bf16.mxu0 0
        %272 = vmatpush1.bf16.msra.mxu0 0
        %273 = vmatprep.subr.bf16.mxu0 0
        %274 = vmatpush1.bf16.msra.mxu0 0
        %275 = vmatprep.mubr.bf16.mxu0 0
        %276 = vmatmul.mubr.bf16.gmra.mrb[0].mxu0 %v234
        %v277 = vpop.f32.mrb[0].mxu0
        %v278 = vadd.f32 0.0, %v277
        %v279 = vpop.f32.mrb[0].mxu0
        %v280 = vadd.f32 0.0, %v279
        %v281 = vpop.f32.mrb[0].mxu0
        %v282 = vpop.f32.mrb[0].mxu0
        %283 = vdwg.mxu0
        %v284 = vld [vmem:[%s2] sm:$0xff]
        %286 = vset.pattern.permute.xlu0 0
        %287 = vperm.xlu0 %286, %v284
        %v288 = vpop.permute.xlu0 %287
        %v290 = vmul.f32 %v278, %v288
        %v291 = vmul.f32 %v280, %v288
        %292 = vset.pattern.permute.xlu0 1
        %293 = vperm.xlu0 %292, %v284
        %v294 = vpop.permute.xlu0 %293
        %v296 = vadd.f32 %v290, %v294
        %v297 = vadd.f32 %v291, %v294
        %v298 = vmax.f32 %v296, 0.0
        %v299 = vmax.f32 %v297, 0.0
        %300 = vst [vmem:[%s188] sm:$0xff] %v298
        %301 = vst [vmem:[%s188 + $0x8] sm:$0xff] %v299
        %s302 = sand.u32 %s109, 1
        %s303 = scalar_lea.sflag [#allocation3], %s302
        %s304 = sand.u32 %s109, 1
        %s305 = smul.addr %s304, 16
        %s306 = scalar_lea.vmem [#allocation2], %s305
        // Predicated region
        $region33: #{tpu_custom_call.1} parent=31 // pred_check
          %p307 = pneg %p119
        $region34: #{tpu_custom_call.1} parent=31 // pred_check_branch
          %309 = sbr.rel (%p307) target = $region36
        $region35: #{tpu_custom_call.1} parent=31 // pred_region
          %s310 = smul.u32 2, %s22
          %s312 = ssub.s32 256, 256
          %313 = vsyncadd %s303, %s312
          %s314 = smul.addr %s21, 2
          %s315 = sadd.s32 %s310, %s314
          %s316 = smul.addr %s315, 128
          %s317 = scalar_lea.hbm %s3, %s316
          %s319 = sshll.u32 %s306, 4
          %s320 = int_to_ptr.vmem [resolvable:$true] %s319
          %322 = dma.vmem_to_hbm [thread:$0]  %s320, 256, %s317, %s303
        $region36: #{tpu_custom_call.1} parent=31 // pred_fallthru
          _
      $region32: #{tpu_custom_call.1} parent=5 // pred_fallthru
        _
      %p323 = scmp.le.s32.totalorder 2, %s12
      // Predicated region
      $region37: #{tpu_custom_call.1} parent=5 // pred_check
        %p324 = pneg %p323
      $region38: #{tpu_custom_call.1} parent=5 // pred_check_branch
        %326 = sbr.rel (%p324) target = $region40
      $region39: #{tpu_custom_call.1} parent=5 // pred_region
        %s327 = ssub.s32 %s12, 2
        // Predicated region
        $region41: #{tpu_custom_call.1} parent=39 // pred_check
          %p328 = pneg %p125
        $region42: #{tpu_custom_call.1} parent=39 // pred_check_branch
          %330 = sbr.rel (%p328) target = $region44
        $region43: #{tpu_custom_call.1} parent=39 // pred_region
          %s331 = sand.u32 %s110, 1
          %s332 = scalar_lea.sflag [#allocation3], %s331
          %s333 = sand.u32 %s110, 1
          %s334 = smul.addr %s333, 16
          %s335 = scalar_lea.vmem [#allocation2], %s334
          %336 = dma.done %s332, 256
        $region44: #{tpu_custom_call.1} parent=39 // pred_fallthru
          _
      $region40: #{tpu_custom_call.1} parent=5 // pred_fallthru
        _
    $region6: #{tpu_custom_call.1} parent=1 // loop_footer
      %s16 = sadd.s32 1, %s12
    $region7: #{tpu_custom_call.1} parent=1 // loop_footer_branch
      %11 = sbr.rel target = $region3
    $region8: #{tpu_custom_call.1} parent=1 // loop_exit
      _
    %337 = vsyncpa [#allocation3], 1
    %s338 = scalar_lea.sflag [#allocation3], 1
    %339 = vsyncpa %s338, 1

</llo_original>
